<compile_context>
chip_gen: v7x
topology: tpu7x:2x2x1
jax: 0.10.0
libtpu: 0.0.40
codegen_flags: <defaults>
</compile_context>

<pallas_src>
import functools

import jax
import jax.numpy as jnp
from jax.experimental import pallas as pl
from jax.experimental.pallas import tpu as pltpu


def _round_up(x, m):
    return ((x + m - 1) // m) * m


def _leaky_relu(x, negative_slope=0.01):
    # Equivalent to where(x>0, x, slope*x) for 0 < slope < 1; one op cheaper.
    return jnp.maximum(x, negative_slope * x)


def _vmem_limit_bytes():
    """Generation-aware scoped-VMEM limit (safe fallback on non-TPU)."""
    try:
        kind = jax.devices()[0].device_kind.lower()
    except Exception:  # pragma: no cover - defensive
        kind = ""
    if "v5" in kind or "v6" in kind:       # 128 MiB physical VMEM
        return 96 * 1024 * 1024
    return 48 * 1024 * 1024                # v7x: 64 MiB/TC -> stay <= 48 MiB


def _resident_spec(shape):
    """BlockSpec for a weight/bias that stays resident across all grid steps.

    Constant index_map -> loaded once; Buffered(1) -> no wasted double buffer.
    """
    index_map = lambda s, i: (0,) * len(shape)
    try:
        return pl.BlockSpec(shape, index_map, pipeline_mode=pl.Buffered(1))
    except TypeError:  # older JAX without pipeline_mode kwarg
        return pl.BlockSpec(shape, index_map)


def _batch_tiling(batch, tile_b_cap, n_samples):
    """Pick a 16-row-aligned batch tile; ensure >=2 grid steps when useful."""
    tile_cap = max(16, (int(tile_b_cap) // 16) * 16)
    b_pad = _round_up(batch, 16)
    tile_b = min(tile_cap, b_pad)
    # v7x has 2 TensorCores: if the sample axis does not already provide >=2
    # grid steps, split the batch so "parallel" semantics can use both cores.
    if n_samples == 1 and b_pad // tile_b < 2 and b_pad >= 32:
        tile_b = _round_up(-(-b_pad // 2), 16)
    b_pad = _round_up(b_pad, tile_b)
    return b_pad, tile_b


def _make_dropout_mask(key, n_samples, b_pad, h_pad, rate):
    """Pre-scaled inverted-dropout mask, values in {0, 1/(1-p)}, bf16."""
    keep_prob = 1.0 - float(rate)
    if keep_prob <= 0.0:                       # p >= 1: drop everything (no 1/0)
        return jnp.zeros((n_samples, b_pad, h_pad), jnp.bfloat16)
    keep = jax.random.bernoulli(key, keep_prob, (n_samples, b_pad, h_pad))
    return (keep.astype(jnp.float32) * (1.0 / keep_prob)).astype(jnp.bfloat16)


def dropout_ff_kernel(x_ref, w_in_ref, b_in_ref, w_h_ref, b_h_ref,
                      w_out_ref, b_out_ref, *rest, num_hidden, apply_dropout):
    if apply_dropout:
        mask_ref, o_ref = rest
    else:
        (o_ref,) = rest

    # Input layer + activation (bf16 MXU matmul, f32 accumulate / activation).
    h = jnp.dot(x_ref[...], w_in_ref[...],
                preferred_element_type=jnp.float32) + b_in_ref[...]
    h = _leaky_relu(h)

    # Hidden layers (static count -> unrolled).
    for l in range(num_hidden):
        h = jnp.dot(h.astype(jnp.bfloat16), w_h_ref[l],
                    preferred_element_type=jnp.float32) + b_h_ref[l]
        h = _leaky_relu(h)

    # Dropout: precomputed, pre-scaled mask (identity in eval mode).
    if apply_dropout:
        h = h * mask_ref[0].astype(jnp.float32)

    # Output layer (lane-dense bf16 store thanks to padded OUT dim).
    out = jnp.dot(h.astype(jnp.bfloat16), w_out_ref[...],
                  preferred_element_type=jnp.float32) + b_out_ref[...]
    o_ref[0] = out.astype(o_ref.dtype)


def dropout_ff_forward(x, params, *, dropout_rate=0.2, training=False,
                       rng_key=None, n_samples=1, tile_b_cap=1024):
    """MLP forward. Returns [n_samples, batch, out_size] (n_samples=1 for eval)."""
    w_in, b_in, w_h, b_h, w_out, b_out = params
    batch, in_size = x.shape
    hidden = w_in.shape[1]
    out_size = w_out.shape[1]
    num_hidden = w_h.shape[0]

    # Pad feature dims to 128 lanes (optimal for all generations at these
    # small sizes; consider 256 only for large H on v6e/v7x).
    IN_P = _round_up(in_size, 128)
    H_P = _round_up(hidden, 128)
    OUT_P = _round_up(out_size, 128)
    B_P, tile_b = _batch_tiling(batch, tile_b_cap, n_samples)
    grid = (n_samples, B_P // tile_b)

    apply_dropout = bool(training) and float(dropout_rate) > 0.0

    # Zero padding is semantics-preserving: padded weight rows/cols and biases
    # are zero, so padded hidden lanes stay exactly 0 through leaky_relu.
    xp = jnp.pad(x.astype(jnp.float32),
                 ((0, B_P - batch), (0, IN_P - in_size))).astype(jnp.bfloat16)
    w_in_p = jnp.pad(w_in, ((0, IN_P - in_size), (0, H_P - hidden))).astype(jnp.bfloat16)
    b_in_p = jnp.pad(b_in, ((0, 0), (0, H_P - hidden))).astype(jnp.float32)
    w_h_p = jnp.pad(w_h, ((0, 0), (0, H_P - hidden), (0, H_P - hidden))).astype(jnp.bfloat16)
    b_h_p = jnp.pad(b_h, ((0, 0), (0, 0), (0, H_P - hidden))).astype(jnp.float32)
    w_out_p = jnp.pad(w_out, ((0, H_P - hidden), (0, OUT_P - out_size))).astype(jnp.bfloat16)
    b_out_p = jnp.pad(b_out, ((0, 0), (0, OUT_P - out_size))).astype(jnp.float32)

    kernel = functools.partial(dropout_ff_kernel, num_hidden=num_hidden,
                               apply_dropout=apply_dropout)

    in_specs = [
        # x tile: index_map ignores the sample axis -> read once per batch tile.
        pl.BlockSpec((tile_b, IN_P), lambda s, i: (i, 0)),
        _resident_spec((IN_P, H_P)),                 # w_in
        _resident_spec((1, H_P)),                    # b_in
        _resident_spec((num_hidden, H_P, H_P)),      # w_h stack
        _resident_spec((num_hidden, 1, H_P)),        # b_h stack
        _resident_spec((H_P, OUT_P)),                # w_out
        _resident_spec((1, OUT_P)),                  # b_out
    ]
    args = [xp, w_in_p, b_in_p, w_h_p, b_h_p, w_out_p, b_out_p]

    if apply_dropout:
        if rng_key is None:
            rng_key = jax.random.PRNGKey(0)
        mask = _make_dropout_mask(rng_key, n_samples, B_P, H_P, dropout_rate)
        in_specs.append(pl.BlockSpec((1, tile_b, H_P), lambda s, i: (s, i, 0)))
        args.append(mask)

    out_specs = pl.BlockSpec((1, tile_b, OUT_P), lambda s, i: (s, i, 0))

    flops = 2 * n_samples * B_P * (IN_P * H_P + num_hidden * H_P * H_P + H_P * OUT_P)
    bytes_accessed = (
        xp.size * 2 + w_in_p.size * 2 + w_h_p.size * 2 + w_out_p.size * 2
        + b_in_p.size * 4 + b_h_p.size * 4 + b_out_p.size * 4
        + n_samples * B_P * OUT_P * 2
        + (n_samples * B_P * H_P * 2 if apply_dropout else 0))

    out_padded = pl.pallas_call(
        kernel,
        out_shape=jax.ShapeDtypeStruct((n_samples, B_P, OUT_P), jnp.bfloat16),
        grid_spec=pltpu.PrefetchScalarGridSpec(
            num_scalar_prefetch=0,
            grid=grid,
            in_specs=in_specs,
            out_specs=out_specs),
        compiler_params=pltpu.CompilerParams(
            dimension_semantics=("parallel", "parallel"),
            vmem_limit_bytes=_vmem_limit_bytes()),
        cost_estimate=pl.CostEstimate(
            flops=flops, transcendentals=0, bytes_accessed=bytes_accessed),
    )(*args)

    # Slice away padding; cast the bf16 output back to f32 outside the kernel.
    return out_padded[:, :batch, :out_size].astype(jnp.float32)


def dropout_ff(x, params, *, dropout_rate=0.2, training=False, rng_key=None):
    """Single forward pass: [batch, out_size]."""
    y = dropout_ff_forward(x, params, dropout_rate=dropout_rate,
                           training=training, rng_key=rng_key, n_samples=1)
    return y[0]


def monte_carlo_predictions(n_samples, x, params, *, dropout_rate=0.2,
                            rng_key=None):
    """Monte-Carlo dropout predictions: [n_samples, batch, out_size].

    x is NOT replicated; the sample axis is a grid dimension, so x and the
    weights are DMA'd from HBM once and only the dropout masks differ.
    """
    return dropout_ff_forward(x, params, dropout_rate=dropout_rate,
                              training=True, rng_key=rng_key,
                              n_samples=n_samples)


def init_params(key, input_size, hidden_size, hidden_count, output_size):
    """PyTorch-Linear-style init: U(-1/sqrt(fan_in), 1/sqrt(fan_in))."""
    def linear(k, fan_in, fan_out):
        kw, kb = jax.random.split(k)
        bound = 1.0 / (fan_in ** 0.5)
        w = jax.random.uniform(kw, (fan_in, fan_out), jnp.float32, -bound, bound)
        b = jax.random.uniform(kb, (1, fan_out), jnp.float32, -bound, bound)
        return w, b

    keys = jax.random.split(key, hidden_count + 2)
    w_in, b_in = linear(keys[0], input_size, hidden_size)

    w_h_list, b_h_list = [], []
    for i in range(hidden_count):
        w, b = linear(keys[1 + i], hidden_size, hidden_size)
        w_h_list.append(w)
        b_h_list.append(b[None])                    # -> [1, 1, H]
    w_h = jnp.stack(w_h_list, axis=0)               # [L, H, H]
    b_h = jnp.concatenate(b_h_list, axis=0)         # [L, 1, H]

    w_out, b_out = linear(keys[-1], hidden_size, output_size)
    return w_in, b_in, w_h, b_h, w_out, b_out


def reference_forward(x, params):
    """Plain-JAX f32 reference of the eval-mode forward pass."""
    w_in, b_in, w_h, b_h, w_out, b_out = params
    h = jnp.where(x @ w_in + b_in > 0, x @ w_in + b_in, 0.01 * (x @ w_in + b_in))
    for l in range(w_h.shape[0]):
        z = h @ w_h[l] + b_h[l]
        h = jnp.where(z > 0, z, 0.01 * z)
    return h @ w_out + b_out


if __name__ == "__main__":
    # DropoutFF(output_size=4, hidden_layer_size=32, hidden_layer_count=2,
    #           input_size=16, dropout=0.2), batch=8, x: [8, 16]
    batch, input_size, hidden_size, hidden_count, output_size = 8, 16, 32, 2, 4

    key = jax.random.PRNGKey(0)
    k_params, k_x, k_do = jax.random.split(key, 3)
    params = init_params(k_params, input_size, hidden_size, hidden_count,
                         output_size)
    x = jax.random.normal(k_x, (batch, input_size), dtype=jnp.float32)

    # Eval-mode forward (dropout == identity) inside the Pallas kernel.
    y = dropout_ff(x, params, dropout_rate=0.2, training=False)
    y = jax.block_until_ready(y)

    y_ref = reference_forward(x, params)
    assert y.shape == (batch, output_size)
    # bf16 matmul inputs / bf16 output with f32 accumulation -> loose tolerance.
    assert jnp.allclose(y, y_ref, atol=5e-2, rtol=5e-2), "mismatch vs JAX reference"

    # Monte-Carlo dropout path (sample axis in the grid, x read once).
    mc = monte_carlo_predictions(4, x, params, dropout_rate=0.2, rng_key=k_do)
    mc = jax.block_until_ready(mc)
    assert mc.shape == (4, batch, output_size)
    assert bool(jnp.all(jnp.isfinite(mc)))

    print("KERNEL_OK")
</pallas_src>

<mosaic_0001>
module attributes {stable_mosaic.version = 11 : i64} {
  func.func @dropout_ff_kernel(%arg0: i32, %arg1: i32, %arg2: memref<16x128xbf16, #tpu.memory_space<vmem>>, %arg3: memref<128x128xbf16, #tpu.memory_space<vmem>>, %arg4: memref<1x128xf32, #tpu.memory_space<vmem>>, %arg5: memref<2x128x128xbf16, #tpu.memory_space<vmem>>, %arg6: memref<2x1x128xf32, #tpu.memory_space<vmem>>, %arg7: memref<128x128xbf16, #tpu.memory_space<vmem>>, %arg8: memref<1x128xf32, #tpu.memory_space<vmem>>, %arg9: memref<1x16x128xbf16, #tpu.memory_space<vmem>>) attributes {dimension_semantics = [#tpu.dimension_semantics<parallel>, #tpu.dimension_semantics<parallel>], iteration_bounds = array<i64: 1, 1>, scalar_prefetch = 0 : i64, scratch_operands = 0 : i64, tpu.core_type = #tpu.core_type<tc>, window_params = [{transform_indices = @transform_0, window_bounds = array<i64: 16, 128>}, {pipeline_mode = #tpu.pipeline_mode<synchronous>, transform_indices = @transform_1, window_bounds = array<i64: 128, 128>}, {pipeline_mode = #tpu.pipeline_mode<synchronous>, transform_indices = @transform_2, window_bounds = array<i64: 1, 128>}, {pipeline_mode = #tpu.pipeline_mode<synchronous>, transform_indices = @transform_3, window_bounds = array<i64: 2, 128, 128>}, {pipeline_mode = #tpu.pipeline_mode<synchronous>, transform_indices = @transform_4, window_bounds = array<i64: 2, 1, 128>}, {pipeline_mode = #tpu.pipeline_mode<synchronous>, transform_indices = @transform_5, window_bounds = array<i64: 128, 128>}, {pipeline_mode = #tpu.pipeline_mode<synchronous>, transform_indices = @transform_6, window_bounds = array<i64: 1, 128>}, {transform_indices = @transform_7, window_bounds = array<i64: 1, 16, 128>}]} {
    %c0 = arith.constant 0 : index
    %c0_0 = arith.constant 0 : index
    %0 = vector.load %arg2[%c0, %c0_0] : memref<16x128xbf16, #tpu.memory_space<vmem>>, vector<16x128xbf16>
    %c0_1 = arith.constant 0 : index
    %c0_2 = arith.constant 0 : index
    %1 = vector.load %arg3[%c0_1, %c0_2] : memref<128x128xbf16, #tpu.memory_space<vmem>>, vector<128x128xbf16>
    %cst = arith.constant dense<0.000000e+00> : vector<16x128xf32>
    %2 = tpu.matmul %0, %1, %cst {dimension_numbers = #tpu.dot_dimension_numbers<[1], [0], [0], [1], [0, 0, 1, 1], [], []>} : vector<16x128xbf16>, vector<128x128xbf16>, vector<16x128xf32> -> vector<16x128xf32>
    %c0_3 = arith.constant 0 : index
    %c0_4 = arith.constant 0 : index
    %3 = vector.load %arg4[%c0_3, %c0_4] : memref<1x128xf32, #tpu.memory_space<vmem>>, vector<1x128xf32>
    %4 = vector.broadcast %3 : vector<1x128xf32> to vector<16x128xf32>
    %5 = arith.addf %2, %4 : vector<16x128xf32>
    %cst_5 = arith.constant 0.00999999977 : f32
    %6 = vector.broadcast %cst_5 : f32 to vector<16x128xf32>
    %7 = arith.mulf %6, %5 : vector<16x128xf32>
    %8 = arith.maximumf %5, %7 : vector<16x128xf32>
    %9 = arith.truncf %8 : vector<16x128xf32> to vector<16x128xbf16>
    %c0_6 = arith.constant 0 : index
    %c0_7 = arith.constant 0 : index
    %c0_8 = arith.constant 0 : index
    %10 = vector.load %arg5[%c0_6, %c0_7, %c0_8] : memref<2x128x128xbf16, #tpu.memory_space<vmem>>, vector<1x128x128xbf16>
    %11 = vector.shape_cast %10 : vector<1x128x128xbf16> to vector<128x128xbf16>
    %cst_9 = arith.constant dense<0.000000e+00> : vector<16x128xf32>
    %12 = tpu.matmul %9, %11, %cst_9 {dimension_numbers = #tpu.dot_dimension_numbers<[1], [0], [0], [1], [0, 0, 1, 1], [], []>} : vector<16x128xbf16>, vector<128x128xbf16>, vector<16x128xf32> -> vector<16x128xf32>
    %c0_10 = arith.constant 0 : index
    %c0_11 = arith.constant 0 : index
    %c0_12 = arith.constant 0 : index
    %13 = vector.load %arg6[%c0_10, %c0_11, %c0_12] : memref<2x1x128xf32, #tpu.memory_space<vmem>>, vector<1x1x128xf32>
    %14 = vector.shape_cast %13 : vector<1x1x128xf32> to vector<1x128xf32>
    %15 = vector.broadcast %14 : vector<1x128xf32> to vector<16x128xf32>
    %16 = arith.addf %12, %15 : vector<16x128xf32>
    %cst_13 = arith.constant 0.00999999977 : f32
    %17 = vector.broadcast %cst_13 : f32 to vector<16x128xf32>
    %18 = arith.mulf %17, %16 : vector<16x128xf32>
    %19 = arith.maximumf %16, %18 : vector<16x128xf32>
    %20 = arith.truncf %19 : vector<16x128xf32> to vector<16x128xbf16>
    %c1 = arith.constant 1 : index
    %c0_14 = arith.constant 0 : index
    %c0_15 = arith.constant 0 : index
    %21 = vector.load %arg5[%c1, %c0_14, %c0_15] : memref<2x128x128xbf16, #tpu.memory_space<vmem>>, vector<1x128x128xbf16>
    %22 = vector.shape_cast %21 : vector<1x128x128xbf16> to vector<128x128xbf16>
    %cst_16 = arith.constant dense<0.000000e+00> : vector<16x128xf32>
    %23 = tpu.matmul %20, %22, %cst_16 {dimension_numbers = #tpu.dot_dimension_numbers<[1], [0], [0], [1], [0, 0, 1, 1], [], []>} : vector<16x128xbf16>, vector<128x128xbf16>, vector<16x128xf32> -> vector<16x128xf32>
    %c1_17 = arith.constant 1 : index
    %c0_18 = arith.constant 0 : index
    %c0_19 = arith.constant 0 : index
    %24 = vector.load %arg6[%c1_17, %c0_18, %c0_19] : memref<2x1x128xf32, #tpu.memory_space<vmem>>, vector<1x1x128xf32>
    %25 = vector.shape_cast %24 : vector<1x1x128xf32> to vector<1x128xf32>
    %26 = vector.broadcast %25 : vector<1x128xf32> to vector<16x128xf32>
    %27 = arith.addf %23, %26 : vector<16x128xf32>
    %cst_20 = arith.constant 0.00999999977 : f32
    %28 = vector.broadcast %cst_20 : f32 to vector<16x128xf32>
    %29 = arith.mulf %28, %27 : vector<16x128xf32>
    %30 = arith.maximumf %27, %29 : vector<16x128xf32>
    %31 = arith.truncf %30 : vector<16x128xf32> to vector<16x128xbf16>
    %c0_21 = arith.constant 0 : index
    %c0_22 = arith.constant 0 : index
    %32 = vector.load %arg7[%c0_21, %c0_22] : memref<128x128xbf16, #tpu.memory_space<vmem>>, vector<128x128xbf16>
    %cst_23 = arith.constant dense<0.000000e+00> : vector<16x128xf32>
    %33 = tpu.matmul %31, %32, %cst_23 {dimension_numbers = #tpu.dot_dimension_numbers<[1], [0], [0], [1], [0, 0, 1, 1], [], []>} : vector<16x128xbf16>, vector<128x128xbf16>, vector<16x128xf32> -> vector<16x128xf32>
    %c0_24 = arith.constant 0 : index
    %c0_25 = arith.constant 0 : index
    %34 = vector.load %arg8[%c0_24, %c0_25] : memref<1x128xf32, #tpu.memory_space<vmem>>, vector<1x128xf32>
    %35 = vector.broadcast %34 : vector<1x128xf32> to vector<16x128xf32>
    %36 = arith.addf %33, %35 : vector<16x128xf32>
    %37 = arith.truncf %36 : vector<16x128xf32> to vector<16x128xbf16>
    %c0_26 = arith.constant 0 : index
    %c0_27 = arith.constant 0 : index
    %c0_28 = arith.constant 0 : index
    %38 = vector.load %arg9[%c0_26, %c0_27, %c0_28] : memref<1x16x128xbf16, #tpu.memory_space<vmem>>, vector<1x16x128xbf16>
    %39 = vector.shape_cast %38 : vector<1x16x128xbf16> to vector<16x128xbf16>
    %40 = vector.shape_cast %37 : vector<16x128xbf16> to vector<1x16x128xbf16>
    tpu.vector_store %arg9[%c0_26, %c0_27, %c0_28], %40 {strides = array<i32>} : memref<1x16x128xbf16, #tpu.memory_space<vmem>>, vector<1x16x128xbf16>,
    return
  }
  func.func @transform_0(%arg0: i32, %arg1: i32) -> (i32, i32) {
    %c0_i32 = arith.constant 0 : i32
    %c0_i32_0 = arith.constant 0 : i32
    return %arg1, %c0_i32 : i32, i32
  }
  func.func @transform_1(%arg0: i32, %arg1: i32) -> (i32, i32) {
    %c0_i32 = arith.constant 0 : i32
    %c0_i32_0 = arith.constant 0 : i32
    %c0_i32_1 = arith.constant 0 : i32
    return %c0_i32, %c0_i32_0 : i32, i32
  }
  func.func @transform_2(%arg0: i32, %arg1: i32) -> (i32, i32) {
    %c0_i32 = arith.constant 0 : i32
    %c0_i32_0 = arith.constant 0 : i32
    %c0_i32_1 = arith.constant 0 : i32
    return %c0_i32, %c0_i32_0 : i32, i32
  }
  func.func @transform_3(%arg0: i32, %arg1: i32) -> (i32, i32, i32) {
    %c0_i32 = arith.constant 0 : i32
    %c0_i32_0 = arith.constant 0 : i32
    %c0_i32_1 = arith.constant 0 : i32
    %c0_i32_2 = arith.constant 0 : i32
    return %c0_i32, %c0_i32_0, %c0_i32_1 : i32, i32, i32
  }
  func.func @transform_4(%arg0: i32, %arg1: i32) -> (i32, i32, i32) {
    %c0_i32 = arith.constant 0 : i32
    %c0_i32_0 = arith.constant 0 : i32
    %c0_i32_1 = arith.constant 0 : i32
    %c0_i32_2 = arith.constant 0 : i32
    return %c0_i32, %c0_i32_0, %c0_i32_1 : i32, i32, i32
  }
  func.func @transform_5(%arg0: i32, %arg1: i32) -> (i32, i32) {
    %c0_i32 = arith.constant 0 : i32
    %c0_i32_0 = arith.constant 0 : i32
    %c0_i32_1 = arith.constant 0 : i32
    return %c0_i32, %c0_i32_0 : i32, i32
  }
  func.func @transform_6(%arg0: i32, %arg1: i32) -> (i32, i32) {
    %c0_i32 = arith.constant 0 : i32
    %c0_i32_0 = arith.constant 0 : i32
    %c0_i32_1 = arith.constant 0 : i32
    return %c0_i32, %c0_i32_0 : i32, i32
  }
  func.func @transform_7(%arg0: i32, %arg1: i32) -> (i32, i32, i32) {
    %c0_i32 = arith.constant 0 : i32
    %c0_i32_0 = arith.constant 0 : i32
    return %arg0, %arg1, %c0_i32 : i32, i32, i32
  }
}

</mosaic_0001>

<llo_original>
// kernel: tpu_custom_call.1
$region0: #{tpu_custom_call.1}
  #allocation0 [shape = 'u32[]', space=smem, size = 0x4, offset = 0x4, fixed_abs, tag = 'smem constant byte address 0x4 - core index']
  #allocation1 [shape = 'u32[144,128]{1,0:T(1,128)}', space=vmem, size = 0x12000, scoped, tag = 'internal scratch']
  %s0 = inlined_call_operand.hbm [shape: bf16[16,128], index: 0, kind: input, shape index: {}]
  %s1 = inlined_call_operand.hbm [shape: bf16[128,128], index: 1, kind: input, shape index: {}]
  %s2 = inlined_call_operand.vmem [shape: f32[1,128], index: 2, kind: input, shape index: {}]
  %s3 = inlined_call_operand.hbm [shape: bf16[2,128,128], index: 3, kind: input, shape index: {}]
  %s4 = inlined_call_operand.vmem [shape: f32[2,1,128], index: 4, kind: input, shape index: {}]
  %s5 = inlined_call_operand.hbm [shape: bf16[128,128], index: 5, kind: input, shape index: {}]
  %s6 = inlined_call_operand.vmem [shape: f32[1,128], index: 6, kind: input, shape index: {}]
  %s7 = inlined_call_operand.hbm [shape: bf16[1,16,128], index: 7, kind: output, shape index: {}]
  %s8 = sld [smem:[#allocation0]]
  $region54: #{tpu_custom_call.1} parent=0
    _
  %s10 = ssub.s32 1, %s8
  %s11 = scalar_select 0, %s10, %s8
  $region1: #{tpu_custom_call.1} parent=0
    #allocation2 [shape = 'u8[4096]{0}', space=vmem, size = 0x1000, scoped, tag = 'input window, operand 0, single buffered']
    #allocation3 [shape = 's32[1]{0}', space=sflag, size = 0x4, scoped, tag = 'scoped memory for tpu_custom_call.1']
    #allocation4 [shape = 's32[1]{0}', space=sflag, size = 0x4, scoped, tag = 'scoped memory for tpu_custom_call.1']
    #allocation5 [shape = 'u8[32768]{0}', space=vmem, size = 0x8000, scoped, tag = 'input window, operand 1, single buffered']
    #allocation6 [shape = 's32[1]{0}', space=sflag, size = 0x4, scoped, tag = 'scoped memory for tpu_custom_call.1']
    #allocation7 [shape = 'u8[65536]{0}', space=vmem, size = 0x10000, scoped, tag = 'input window, operand 3, single buffered']
    #allocation8 [shape = 'u8[32768]{0}', space=vmem, size = 0x8000, scoped, tag = 'input window, operand 5, single buffered']
    #allocation9 [shape = 's32[1]{0}', space=sflag, size = 0x4, scoped, tag = 'scoped memory for tpu_custom_call.1']
    #allocation10 [shape = 'u8[4096]{0}', space=vmem, size = 0x1000, scoped, tag = 'output window, operand 0, single buffered']
    %12 = vsyncpa [#allocation3], 0
    %13 = vsyncpa [#allocation6], 0
    %14 = vsyncpa [#allocation9], 0
    %15 = vsyncpa [#allocation4], 0
    // Predicated region
    $region2: #{tpu_custom_call.1} parent=1 // pred_check
      _
    $region3: #{tpu_custom_call.1} parent=1 // pred_check_branch
      %17 = sbr.rel (0) target = $region5
    $region4: #{tpu_custom_call.1} parent=1 // pred_region
      %s19 = ssub.s32 128, 128
      %20 = vsyncadd [#allocation3], %s19
      %s21 = sshll.u32 [#allocation2], 4
      %s22 = int_to_ptr.vmem [resolvable:$true] %s21
      %27 = dma.hbm_to_vmem [thread:$0]  %s0, 128, %s22, [#allocation3], 64, 64, 4
    $region5: #{tpu_custom_call.1} parent=1 // pred_fallthru
      _
    // Predicated region
    $region6: #{tpu_custom_call.1} parent=1 // pred_check
      _
    $region7: #{tpu_custom_call.1} parent=1 // pred_check_branch
      %29 = sbr.rel (0) target = $region9
    $region8: #{tpu_custom_call.1} parent=1 // pred_region
      %s31 = ssub.s32 1024, 1024
      %32 = vsyncadd [#allocation6], %s31
      %s33 = sshll.u32 [#allocation5], 4
      %s34 = int_to_ptr.vmem [resolvable:$true] %s33
      %39 = dma.hbm_to_vmem [thread:$0]  %s1, 1024, %s34, [#allocation6], 64, 64, 4
    $region9: #{tpu_custom_call.1} parent=1 // pred_fallthru
      _
    // Predicated region
    $region10: #{tpu_custom_call.1} parent=1 // pred_check
      _
    $region11: #{tpu_custom_call.1} parent=1 // pred_check_branch
      %41 = sbr.rel (0) target = $region13
    $region12: #{tpu_custom_call.1} parent=1 // pred_region
      _
    $region13: #{tpu_custom_call.1} parent=1 // pred_fallthru
      _
    // Predicated region
    $region14: #{tpu_custom_call.1} parent=1 // pred_check
      _
    $region15: #{tpu_custom_call.1} parent=1 // pred_check_branch
      %43 = sbr.rel (0) target = $region17
    $region16: #{tpu_custom_call.1} parent=1 // pred_region
      %s45 = ssub.s32 2048, 2048
      %46 = vsyncadd [#allocation6], %s45
      %s47 = sshll.u32 [#allocation7], 4
      %s48 = int_to_ptr.vmem [resolvable:$true] %s47
      %53 = dma.hbm_to_vmem [thread:$0]  %s3, 2048, %s48, [#allocation6], 64, 64, 4
    $region17: #{tpu_custom_call.1} parent=1 // pred_fallthru
      _
    // Predicated region
    $region18: #{tpu_custom_call.1} parent=1 // pred_check
      _
    $region19: #{tpu_custom_call.1} parent=1 // pred_check_branch
      %55 = sbr.rel (0) target = $region21
    $region20: #{tpu_custom_call.1} parent=1 // pred_region
      _
    $region21: #{tpu_custom_call.1} parent=1 // pred_fallthru
      _
    // Predicated region
    $region22: #{tpu_custom_call.1} parent=1 // pred_check
      _
    $region23: #{tpu_custom_call.1} parent=1 // pred_check_branch
      %57 = sbr.rel (0) target = $region25
    $region24: #{tpu_custom_call.1} parent=1 // pred_region
      %s59 = ssub.s32 1024, 1024
      %60 = vsyncadd [#allocation9], %s59
      %s61 = sshll.u32 [#allocation8], 4
      %s62 = int_to_ptr.vmem [resolvable:$true] %s61
      %67 = dma.hbm_to_vmem [thread:$0]  %s5, 1024, %s62, [#allocation9], 64, 64, 4
    $region25: #{tpu_custom_call.1} parent=1 // pred_fallthru
      _
    // Predicated region
    $region26: #{tpu_custom_call.1} parent=1 // pred_check
      _
    $region27: #{tpu_custom_call.1} parent=1 // pred_check_branch
      %69 = sbr.rel (0) target = $region29
    $region28: #{tpu_custom_call.1} parent=1 // pred_region
      _
    $region29: #{tpu_custom_call.1} parent=1 // pred_fallthru
      _
    // Predicated region
    $region30: #{tpu_custom_call.1} parent=1 // pred_check
      _
    $region31: #{tpu_custom_call.1} parent=1 // pred_check_branch
      %71 = sbr.rel (0) target = $region33
    $region32: #{tpu_custom_call.1} parent=1 // pred_region
      %72 = dma.done [#allocation3], 128
    $region33: #{tpu_custom_call.1} parent=1 // pred_fallthru
      _
    // Predicated region
    $region34: #{tpu_custom_call.1} parent=1 // pred_check
      _
    $region35: #{tpu_custom_call.1} parent=1 // pred_check_branch
      %74 = sbr.rel (0) target = $region37
    $region36: #{tpu_custom_call.1} parent=1 // pred_region
      %75 = dma.done [#allocation6], 1024
    $region37: #{tpu_custom_call.1} parent=1 // pred_fallthru
      _
    // Predicated region
    $region38: #{tpu_custom_call.1} parent=1 // pred_check
      _
    $region39: #{tpu_custom_call.1} parent=1 // pred_check_branch
      %77 = sbr.rel (0) target = $region41
    $region40: #{tpu_custom_call.1} parent=1 // pred_region
      %78 = dma.done [#allocation6], 2048
    $region41: #{tpu_custom_call.1} parent=1 // pred_fallthru
      _
    // Predicated region
    $region42: #{tpu_custom_call.1} parent=1 // pred_check
      _
    $region43: #{tpu_custom_call.1} parent=1 // pred_check_branch
      %80 = sbr.rel (0) target = $region45
    $region44: #{tpu_custom_call.1} parent=1 // pred_region
      %81 = dma.done [#allocation9], 1024
    $region45: #{tpu_custom_call.1} parent=1 // pred_fallthru
      _
    %v83 = vld [vmem:[#allocation2] sm:$0xf]
    %v84 = vld [vmem:[#allocation2 + $0x4] sm:$0xf]
    %v85 = vld [vmem:[#allocation5] sm:$0xf]
    %v86 = vld [vmem:[#allocation5 + $0x4] sm:$0xf]
    %v87 = vld [vmem:[#allocation5 + $0x8] sm:$0xf]
    %v88 = vld [vmem:[#allocation5 + $0xc] sm:$0xf]
    %v89 = vld [vmem:[#allocation5 + $0x10] sm:$0xf]
    %v90 = vld [vmem:[#allocation5 + $0x14] sm:$0xf]
    %v91 = vld [vmem:[#allocation5 + $0x18] sm:$0xf]
    %v92 = vld [vmem:[#allocation5 + $0x1c] sm:$0xf]
    %v93 = vld [vmem:[#allocation5 + $0x20] sm:$0xf]
    %v94 = vld [vmem:[#allocation5 + $0x24] sm:$0xf]
    %v95 = vld [vmem:[#allocation5 + $0x28] sm:$0xf]
    %v96 = vld [vmem:[#allocation5 + $0x2c] sm:$0xf]
    %v97 = vld [vmem:[#allocation5 + $0x30] sm:$0xf]
    %v98 = vld [vmem:[#allocation5 + $0x34] sm:$0xf]
    %v99 = vld [vmem:[#allocation5 + $0x38] sm:$0xf]
    %v100 = vld [vmem:[#allocation5 + $0x3c] sm:$0xf]
    %v101 = vld [vmem:[%s2] sm:$0x1]
    %v103 = vlaneseq
    %v104 = vshrl.u32 %v103, 7
    %v105 = vsub.s32 0, %v104
    %v106 = vrot.slane %v101, %v105
    %v110 = vunpack.c.l.b16 %v83
    %v111 = vunpack.c.l.b16 %v84
    %v112 = vpack.c.b16 %v111, %v110
    %v130 = vunpack.c.l.b16 %v85
    %v131 = vunpack.c.l.b16 %v86
    %v132 = vunpack.c.l.b16 %v87
    %v133 = vunpack.c.l.b16 %v88
    %v134 = vunpack.c.l.b16 %v89
    %v135 = vunpack.c.l.b16 %v90
    %v136 = vunpack.c.l.b16 %v91
    %v137 = vunpack.c.l.b16 %v92
    %v138 = vunpack.c.l.b16 %v93
    %v139 = vunpack.c.l.b16 %v94
    %v140 = vunpack.c.l.b16 %v95
    %v141 = vunpack.c.l.b16 %v96
    %v142 = vunpack.c.l.b16 %v97
    %v143 = vunpack.c.l.b16 %v98
    %v144 = vunpack.c.l.b16 %v99
    %v145 = vunpack.c.l.b16 %v100
    %v146 = vpack.c.b16 %v131, %v130
    %v147 = vpack.c.b16 %v133, %v132
    %v148 = vpack.c.b16 %v135, %v134
    %v149 = vpack.c.b16 %v137, %v136
    %v150 = vpack.c.b16 %v139, %v138
    %v151 = vpack.c.b16 %v141, %v140
    %v152 = vpack.c.b16 %v143, %v142
    %v153 = vpack.c.b16 %v145, %v144
    %162 = vmatprep.subr.bf16.mxu0 0
    %163 = vmatpush1.bf16.msra.mxu0 %v146
    %164 = vmatprep.subr.bf16.mxu0 0
    %165 = vmatpush1.bf16.msra.mxu0 %v147
    %166 = vmatprep.subr.bf16.mxu0 0
    %167 = vmatpush1.bf16.msra.mxu0 %v148
    %168 = vmatprep.subr.bf16.mxu0 0
    %169 = vmatpush1.bf16.msra.mxu0 %v149
    %170 = vmatprep.subr.bf16.mxu0 0
    %171 = vmatpush1.bf16.msra.mxu0 %v150
    %172 = vmatprep.subr.bf16.mxu0 0
    %173 = vmatpush1.bf16.msra.mxu0 %v151
    %174 = vmatprep.subr.bf16.mxu0 0
    %175 = vmatpush1.bf16.msra.mxu0 %v152
    %176 = vmatprep.subr.bf16.mxu0 0
    %177 = vmatpush1.bf16.msra.mxu0 %v153
    %178 = vmatprep.subr.bf16.mxu0 0
    %179 = vmatpush1.bf16.msra.mxu0 0
    %180 = vmatprep.subr.bf16.mxu0 0
    %181 = vmatpush1.bf16.msra.mxu0 0
    %182 = vmatprep.subr.bf16.mxu0 0
    %183 = vmatpush1.bf16.msra.mxu0 0
    %184 = vmatprep.subr.bf16.mxu0 0
    %185 = vmatpush1.bf16.msra.mxu0 0
    %186 = vmatprep.subr.bf16.mxu0 0
    %187 = vmatpush1.bf16.msra.mxu0 0
    %188 = vmatprep.subr.bf16.mxu0 0
    %189 = vmatpush1.bf16.msra.mxu0 0
    %190 = vmatprep.subr.bf16.mxu0 0
    %191 = vmatpush1.bf16.msra.mxu0 0
    %192 = vmatprep.subr.bf16.mxu0 0
    %193 = vmatpush1.bf16.msra.mxu0 0
    %194 = vmatprep.mubr.bf16.mxu0 0
    %195 = vmatmul.mubr.bf16.gmra.mrb[0].mxu0 %v112
    %v196 = vpop.f32.mrb[0].mxu0
    %v197 = vadd.f32 %v106, %v196
    %v198 = vpop.f32.mrb[0].mxu0
    %v199 = vpop.f32.mrb[0].mxu0
    %v200 = vadd.f32 %v106, %v199
    %v201 = vpop.f32.mrb[0].mxu0
    %202 = vdwg.mxu0
    %v203 = vmul.f32 %v197, 0.01
    %v204 = vmul.f32 %v200, 0.01
    %v205 = vmax.f32 %v197, %v203
    %v206 = vmax.f32 %v200, %v204
    %v207 = vpack.c.bf16 %v206, %v205
    %v208 = vld [vmem:[#allocation7] sm:$0xf]
    %v209 = vld [vmem:[#allocation7 + $0x4] sm:$0xf]
    %v210 = vld [vmem:[#allocation7 + $0x8] sm:$0xf]
    %v211 = vld [vmem:[#allocation7 + $0xc] sm:$0xf]
    %v212 = vld [vmem:[#allocation7 + $0x10] sm:$0xf]
    %v213 = vld [vmem:[#allocation7 + $0x14] sm:$0xf]
    %v214 = vld [vmem:[#allocation7 + $0x18] sm:$0xf]
    %v215 = vld [vmem:[#allocation7 + $0x1c] sm:$0xf]
    %v216 = vld [vmem:[#allocation7 + $0x20] sm:$0xf]
    %v217 = vld [vmem:[#allocation7 + $0x24] sm:$0xf]
    %v218 = vld [vmem:[#allocation7 + $0x28] sm:$0xf]
    %v219 = vld [vmem:[#allocation7 + $0x2c] sm:$0xf]
    %v220 = vld [vmem:[#allocation7 + $0x30] sm:$0xf]
    %v221 = vld [vmem:[#allocation7 + $0x34] sm:$0xf]
    %v222 = vld [vmem:[#allocation7 + $0x38] sm:$0xf]
    %v223 = vld [vmem:[#allocation7 + $0x3c] sm:$0xf]
    %v224 = vld [vmem:[%s4] sm:$0x1]
    %v226 = vlaneseq
    %v227 = vshrl.u32 %v226, 7
    %v228 = vsub.s32 0, %v227
    %v229 = vrot.slane %v224, %v228
    %v247 = vunpack.c.l.b16 %v208
    %v248 = vunpack.c.l.b16 %v209
    %v249 = vunpack.c.l.b16 %v210
    %v250 = vunpack.c.l.b16 %v211
    %v251 = vunpack.c.l.b16 %v212
    %v252 = vunpack.c.l.b16 %v213
    %v253 = vunpack.c.l.b16 %v214
    %v254 = vunpack.c.l.b16 %v215
    %v255 = vunpack.c.l.b16 %v216
    %v256 = vunpack.c.l.b16 %v217
    %v257 = vunpack.c.l.b16 %v218
    %v258 = vunpack.c.l.b16 %v219
    %v259 = vunpack.c.l.b16 %v220
    %v260 = vunpack.c.l.b16 %v221
    %v261 = vunpack.c.l.b16 %v222
    %v262 = vunpack.c.l.b16 %v223
    %v263 = vpack.c.b16 %v248, %v247
    %v264 = vpack.c.b16 %v250, %v249
    %v265 = vpack.c.b16 %v252, %v251
    %v266 = vpack.c.b16 %v254, %v253
    %v267 = vpack.c.b16 %v256, %v255
    %v268 = vpack.c.b16 %v258, %v257
    %v269 = vpack.c.b16 %v260, %v259
    %v270 = vpack.c.b16 %v262, %v261
    %279 = vmatprep.subr.bf16.mxu0 0
    %280 = vmatpush1.bf16.msra.mxu0 %v263
    %281 = vmatprep.subr.bf16.mxu0 0
    %282 = vmatpush1.bf16.msra.mxu0 %v264
    %283 = vmatprep.subr.bf16.mxu0 0
    %284 = vmatpush1.bf16.msra.mxu0 %v265
    %285 = vmatprep.subr.bf16.mxu0 0
    %286 = vmatpush1.bf16.msra.mxu0 %v266
    %287 = vmatprep.subr.bf16.mxu0 0
    %288 = vmatpush1.bf16.msra.mxu0 %v267
    %289 = vmatprep.subr.bf16.mxu0 0
    %290 = vmatpush1.bf16.msra.mxu0 %v268
    %291 = vmatprep.subr.bf16.mxu0 0
    %292 = vmatpush1.bf16.msra.mxu0 %v269
    %293 = vmatprep.subr.bf16.mxu0 0
    %294 = vmatpush1.bf16.msra.mxu0 %v270
    %295 = vmatprep.subr.bf16.mxu0 0
    %296 = vmatpush1.bf16.msra.mxu0 0
    %297 = vmatprep.subr.bf16.mxu0 0
    %298 = vmatpush1.bf16.msra.mxu0 0
    %299 = vmatprep.subr.bf16.mxu0 0
    %300 = vmatpush1.bf16.msra.mxu0 0
    %301 = vmatprep.subr.bf16.mxu0 0
    %302 = vmatpush1.bf16.msra.mxu0 0
    %303 = vmatprep.subr.bf16.mxu0 0
    %304 = vmatpush1.bf16.msra.mxu0 0
    %305 = vmatprep.subr.bf16.mxu0 0
    %306 = vmatpush1.bf16.msra.mxu0 0
    %307 = vmatprep.subr.bf16.mxu0 0
    %308 = vmatpush1.bf16.msra.mxu0 0
    %309 = vmatprep.subr.bf16.mxu0 0
    %310 = vmatpush1.bf16.msra.mxu0 0
    %311 = vmatprep.mubr.bf16.mxu0 0
    %312 = vmatmul.mubr.bf16.gmra.mrb[0].mxu0 %v207
    %v313 = vpop.f32.mrb[0].mxu0
    %v314 = vadd.f32 %v229, %v313
    %v315 = vpop.f32.mrb[0].mxu0
    %v316 = vpop.f32.mrb[0].mxu0
    %v317 = vadd.f32 %v229, %v316
    %v318 = vpop.f32.mrb[0].mxu0
    %319 = vdwg.mxu0
    %v320 = vmul.f32 %v314, 0.01
    %v321 = vmul.f32 %v317, 0.01
    %v322 = vmax.f32 %v314, %v320
    %v323 = vmax.f32 %v317, %v321
    %v324 = vpack.c.bf16 %v323, %v322
    %s325 = scalar_lea.vmem [#allocation7], 64
    %v326 = vld [vmem:[%s325] sm:$0xf]
    %v327 = vld [vmem:[%s325 + $0x4] sm:$0xf]
    %v328 = vld [vmem:[%s325 + $0x8] sm:$0xf]
    %v329 = vld [vmem:[%s325 + $0xc] sm:$0xf]
    %v330 = vld [vmem:[%s325 + $0x10] sm:$0xf]
    %v331 = vld [vmem:[%s325 + $0x14] sm:$0xf]
    %v332 = vld [vmem:[%s325 + $0x18] sm:$0xf]
    %v333 = vld [vmem:[%s325 + $0x1c] sm:$0xf]
    %v334 = vld [vmem:[%s325 + $0x20] sm:$0xf]
    %v335 = vld [vmem:[%s325 + $0x24] sm:$0xf]
    %v336 = vld [vmem:[%s325 + $0x28] sm:$0xf]
    %v337 = vld [vmem:[%s325 + $0x2c] sm:$0xf]
    %v338 = vld [vmem:[%s325 + $0x30] sm:$0xf]
    %v339 = vld [vmem:[%s325 + $0x34] sm:$0xf]
    %v340 = vld [vmem:[%s325 + $0x38] sm:$0xf]
    %v341 = vld [vmem:[%s325 + $0x3c] sm:$0xf]
    %s342 = scalar_lea.vmem %s4, 1
    %v343 = vld [vmem:[%s342] sm:$0x1]
    %v345 = vlaneseq
    %v346 = vshrl.u32 %v345, 7
    %v347 = vsub.s32 0, %v346
    %v348 = vrot.slane %v343, %v347
    %v366 = vunpack.c.l.b16 %v326
    %v367 = vunpack.c.l.b16 %v327
    %v368 = vunpack.c.l.b16 %v328
    %v369 = vunpack.c.l.b16 %v329
    %v370 = vunpack.c.l.b16 %v330
    %v371 = vunpack.c.l.b16 %v331
    %v372 = vunpack.c.l.b16 %v332
    %v373 = vunpack.c.l.b16 %v333
    %v374 = vunpack.c.l.b16 %v334
    %v375 = vunpack.c.l.b16 %v335
    %v376 = vunpack.c.l.b16 %v336
    %v377 = vunpack.c.l.b16 %v337
    %v378 = vunpack.c.l.b16 %v338
    %v379 = vunpack.c.l.b16 %v339
    %v380 = vunpack.c.l.b16 %v340
    %v381 = vunpack.c.l.b16 %v341
    %v382 = vpack.c.b16 %v367, %v366
    %v383 = vpack.c.b16 %v369, %v368
    %v384 = vpack.c.b16 %v371, %v370
    %v385 = vpack.c.b16 %v373, %v372
    %v386 = vpack.c.b16 %v375, %v374
    %v387 = vpack.c.b16 %v377, %v376
    %v388 = vpack.c.b16 %v379, %v378
    %v389 = vpack.c.b16 %v381, %v380
    %398 = vmatprep.subr.bf16.mxu0 0
    %399 = vmatpush1.bf16.msra.mxu0 %v382
    %400 = vmatprep.subr.bf16.mxu0 0
    %401 = vmatpush1.bf16.msra.mxu0 %v383
    %402 = vmatprep.subr.bf16.mxu0 0
    %403 = vmatpush1.bf16.msra.mxu0 %v384
    %404 = vmatprep.subr.bf16.mxu0 0
    %405 = vmatpush1.bf16.msra.mxu0 %v385
    %406 = vmatprep.subr.bf16.mxu0 0
    %407 = vmatpush1.bf16.msra.mxu0 %v386
    %408 = vmatprep.subr.bf16.mxu0 0
    %409 = vmatpush1.bf16.msra.mxu0 %v387
    %410 = vmatprep.subr.bf16.mxu0 0
    %411 = vmatpush1.bf16.msra.mxu0 %v388
    %412 = vmatprep.subr.bf16.mxu0 0
    %413 = vmatpush1.bf16.msra.mxu0 %v389
    %414 = vmatprep.subr.bf16.mxu0 0
    %415 = vmatpush1.bf16.msra.mxu0 0
    %416 = vmatprep.subr.bf16.mxu0 0
    %417 = vmatpush1.bf16.msra.mxu0 0
    %418 = vmatprep.subr.bf16.mxu0 0
    %419 = vmatpush1.bf16.msra.mxu0 0
    %420 = vmatprep.subr.bf16.mxu0 0
    %421 = vmatpush1.bf16.msra.mxu0 0
    %422 = vmatprep.subr.bf16.mxu0 0
    %423 = vmatpush1.bf16.msra.mxu0 0
    %424 = vmatprep.subr.bf16.mxu0 0
    %425 = vmatpush1.bf16.msra.mxu0 0
    %426 = vmatprep.subr.bf16.mxu0 0
    %427 = vmatpush1.bf16.msra.mxu0 0
    %428 = vmatprep.subr.bf16.mxu0 0
    %429 = vmatpush1.bf16.msra.mxu0 0
    %430 = vmatprep.mubr.bf16.mxu0 0
    %431 = vmatmul.mubr.bf16.gmra.mrb[0].mxu0 %v324
    %v432 = vpop.f32.mrb[0].mxu0
    %v433 = vadd.f32 %v348, %v432
    %v434 = vpop.f32.mrb[0].mxu0
    %v435 = vpop.f32.mrb[0].mxu0
    %v436 = vadd.f32 %v348, %v435
    %v437 = vpop.f32.mrb[0].mxu0
    %438 = vdwg.mxu0
    %v439 = vmul.f32 %v433, 0.01
    %v440 = vmul.f32 %v436, 0.01
    %v441 = vmax.f32 %v433, %v439
    %v442 = vmax.f32 %v436, %v440
    %v443 = vpack.c.bf16 %v442, %v441
    %v444 = vld [vmem:[#allocation8] sm:$0xf]
    %v445 = vld [vmem:[#allocation8 + $0x4] sm:$0xf]
    %v446 = vld [vmem:[#allocation8 + $0x8] sm:$0xf]
    %v447 = vld [vmem:[#allocation8 + $0xc] sm:$0xf]
    %v448 = vld [vmem:[#allocation8 + $0x10] sm:$0xf]
    %v449 = vld [vmem:[#allocation8 + $0x14] sm:$0xf]
    %v450 = vld [vmem:[#allocation8 + $0x18] sm:$0xf]
    %v451 = vld [vmem:[#allocation8 + $0x1c] sm:$0xf]
    %v452 = vld [vmem:[#allocation8 + $0x20] sm:$0xf]
    %v453 = vld [vmem:[#allocation8 + $0x24] sm:$0xf]
    %v454 = vld [vmem:[#allocation8 + $0x28] sm:$0xf]
    %v455 = vld [vmem:[#allocation8 + $0x2c] sm:$0xf]
    %v456 = vld [vmem:[#allocation8 + $0x30] sm:$0xf]
    %v457 = vld [vmem:[#allocation8 + $0x34] sm:$0xf]
    %v458 = vld [vmem:[#allocation8 + $0x38] sm:$0xf]
    %v459 = vld [vmem:[#allocation8 + $0x3c] sm:$0xf]
    %v460 = vld [vmem:[%s6] sm:$0x1]
    %v462 = vlaneseq
    %v463 = vshrl.u32 %v462, 7
    %v464 = vsub.s32 0, %v463
    %v465 = vrot.slane %v460, %v464
    %v483 = vunpack.c.l.b16 %v444
    %v484 = vunpack.c.l.b16 %v445
    %v485 = vunpack.c.l.b16 %v446
    %v486 = vunpack.c.l.b16 %v447
    %v487 = vunpack.c.l.b16 %v448
    %v488 = vunpack.c.l.b16 %v449
    %v489 = vunpack.c.l.b16 %v450
    %v490 = vunpack.c.l.b16 %v451
    %v491 = vunpack.c.l.b16 %v452
    %v492 = vunpack.c.l.b16 %v453
    %v493 = vunpack.c.l.b16 %v454
    %v494 = vunpack.c.l.b16 %v455
    %v495 = vunpack.c.l.b16 %v456
    %v496 = vunpack.c.l.b16 %v457
    %v497 = vunpack.c.l.b16 %v458
    %v498 = vunpack.c.l.b16 %v459
    %v499 = vpack.c.b16 %v484, %v483
    %v500 = vpack.c.b16 %v486, %v485
    %v501 = vpack.c.b16 %v488, %v487
    %v502 = vpack.c.b16 %v490, %v489
    %v503 = vpack.c.b16 %v492, %v491
    %v504 = vpack.c.b16 %v494, %v493
    %v505 = vpack.c.b16 %v496, %v495
    %v506 = vpack.c.b16 %v498, %v497
    %515 = vmatprep.subr.bf16.mxu0 0
    %516 = vmatpush1.bf16.msra.mxu0 %v499
    %517 = vmatprep.subr.bf16.mxu0 0
    %518 = vmatpush1.bf16.msra.mxu0 %v500
    %519 = vmatprep.subr.bf16.mxu0 0
    %520 = vmatpush1.bf16.msra.mxu0 %v501
    %521 = vmatprep.subr.bf16.mxu0 0
    %522 = vmatpush1.bf16.msra.mxu0 %v502
    %523 = vmatprep.subr.bf16.mxu0 0
    %524 = vmatpush1.bf16.msra.mxu0 %v503
    %525 = vmatprep.subr.bf16.mxu0 0
    %526 = vmatpush1.bf16.msra.mxu0 %v504
    %527 = vmatprep.subr.bf16.mxu0 0
    %528 = vmatpush1.bf16.msra.mxu0 %v505
    %529 = vmatprep.subr.bf16.mxu0 0
    %530 = vmatpush1.bf16.msra.mxu0 %v506
    %531 = vmatprep.subr.bf16.mxu0 0
    %532 = vmatpush1.bf16.msra.mxu0 0
    %533 = vmatprep.subr.bf16.mxu0 0
    %534 = vmatpush1.bf16.msra.mxu0 0
    %535 = vmatprep.subr.bf16.mxu0 0
    %536 = vmatpush1.bf16.msra.mxu0 0
    %537 = vmatprep.subr.bf16.mxu0 0
    %538 = vmatpush1.bf16.msra.mxu0 0
    %539 = vmatprep.subr.bf16.mxu0 0
    %540 = vmatpush1.bf16.msra.mxu0 0
    %541 = vmatprep.subr.bf16.mxu0 0
    %542 = vmatpush1.bf16.msra.mxu0 0
    %543 = vmatprep.subr.bf16.mxu0 0
    %544 = vmatpush1.bf16.msra.mxu0 0
    %545 = vmatprep.subr.bf16.mxu0 0
    %546 = vmatpush1.bf16.msra.mxu0 0
    %547 = vmatprep.mubr.bf16.mxu0 0
    %548 = vmatmul.mubr.bf16.gmra.mrb[0].mxu0 %v443
    %v549 = vpop.f32.mrb[0].mxu0
    %v550 = vadd.f32 %v465, %v549
    %v551 = vpop.f32.mrb[0].mxu0
    %v552 = vpop.f32.mrb[0].mxu0
    %v553 = vadd.f32 %v465, %v552
    %v554 = vpop.f32.mrb[0].mxu0
    %555 = vdwg.mxu0
    %v556 = vpack.c.bf16 %v553, %v550
    %v558 = vunpack.c.l.b16 %v556
    %v559 = vunpack.c.h.b16 %v556
    %v560 = vpack.c.b16 %v558, %v558
    %v561 = vpack.c.b16 %v559, %v559
    %564 = vst [vmem:[#allocation10] sm:$0xf] %v560
    %565 = vst [vmem:[#allocation10 + $0x4] sm:$0xf] %v561
    // Predicated region
    $region46: #{tpu_custom_call.1} parent=1 // pred_check
      _
    $region47: #{tpu_custom_call.1} parent=1 // pred_check_branch
      %567 = sbr.rel (0) target = $region49
    $region48: #{tpu_custom_call.1} parent=1 // pred_region
      %s569 = ssub.s32 128, 128
      %570 = vsyncadd [#allocation4], %s569
      %s571 = sshll.u32 [#allocation10], 4
      %s572 = int_to_ptr.vmem [resolvable:$true] %s571
      %577 = dma.vmem_to_hbm [thread:$0]  %s572, 128, %s7, [#allocation4], 64, 64, 4
    $region49: #{tpu_custom_call.1} parent=1 // pred_fallthru
      _
    // Predicated region
    $region50: #{tpu_custom_call.1} parent=1 // pred_check
      _
    $region51: #{tpu_custom_call.1} parent=1 // pred_check_branch
      %579 = sbr.rel (0) target = $region53
    $region52: #{tpu_custom_call.1} parent=1 // pred_region
      %580 = dma.done [#allocation4], 128
    $region53: #{tpu_custom_call.1} parent=1 // pred_fallthru
      _
    %581 = vsyncpa [#allocation3], 1
    %582 = vsyncpa [#allocation6], 1
    %583 = vsyncpa [#allocation9], 1
    %584 = vsyncpa [#allocation4], 1

</llo_original>
